<compile_context>
chip_gen: v5e
topology: v5e:2x2
jax: 0.10.0
libtpu: 0.0.40
codegen_flags: <defaults>
</compile_context>

<pallas_src>
import numpy as np
import jax
import jax.numpy as jnp
from jax import lax
from jax.experimental import pallas as pl
from jax.experimental.pallas import tpu as pltpu

THETA = 0.5
BN_EPS = 1e-5
_LANES = 128


def _round_up(x, m):
    return (x + m - 1) // m * m


# ----------------------------------------------------------------------------
# Parameter preparation (trace-time glue, plain JAX / numpy constants)
# ----------------------------------------------------------------------------
def make_effective_pdc_weight(w_raw, theta):
    """w_raw: (Cout, Cin, 1, 8) -> effective 3x3 kernel, HWIO (3, 3, Cin, Cout).

    Conv_PDC = conv(x, w3x3 with zero centre) - theta * conv(x, sum(w) 1x1), i.e. a single
    3x3 conv whose centre tap is -theta * sum(w).
    """
    c_out, c_in, _, _ = w_raw.shape
    w8 = w_raw[:, :, 0, :]                                              # (Cout, Cin, 8)
    zeros = jnp.zeros((c_out, c_in, 1), w_raw.dtype)
    w9 = jnp.concatenate([w8[:, :, 0:4], zeros, w8[:, :, 4:8]], axis=2)  # (Cout,Cin,9)
    kernel_diff = jnp.sum(w8, axis=2)                                   # (Cout, Cin)
    w9 = w9.at[:, :, 4].set(-theta * kernel_diff)
    w33 = w9.reshape(c_out, c_in, 3, 3)                                 # OIHW
    return jnp.transpose(w33, (2, 3, 1, 0))                             # HWIO


def _stacked_band_matrix(w_hwio, width, in_lane_pad):
    """(3,3,Cin,Cout) HWIO -> (3*in_lane_pad, W*Cout) stacked banded tap matrix.

    Row [kh*in_lane_pad + wi*Cin + ci], col [w*Cout + co] = Weff[kh, kw, ci, co] with
    wi = w + kw - 1; out-of-range kw taps dropped (== zero SAME W-padding).  The kh shift
    is done in-kernel with sublane rolls, so the three kh blocks are stacked along rows.
    Rows >= W*Cin inside each kh block are zero (they face the zero-padded input lanes).
    """
    _, _, c_in, c_out = w_hwio.shape
    sel = np.zeros((3, width, width), np.float32)                       # (kw, wi, w)
    for kw in range(3):
        for w in range(width):
            wi = w + kw - 1
            if 0 <= wi < width:
                sel[kw, wi, w] = 1.0
    m = jnp.einsum("kvu,hkio->hviuo", jnp.asarray(sel), w_hwio,
                   precision=lax.Precision.HIGHEST)                     # exact 0/1 selection
    m = m.reshape(3, width * c_in, width * c_out)
    if in_lane_pad > width * c_in:
        m = jnp.pad(m, ((0, 0), (0, in_lane_pad - width * c_in), (0, 0)))
    return m.reshape(3 * in_lane_pad, width * c_out)


def _bn_projection(width, c_out, inv_count):
    """Block-diag [P 0; 0 P] with P[l,l'] = inv_count iff lanes l,l' share a channel.

    [row_sum | row_sumsq] (1, 2L) @ this -> [mean_l | E[x^2]_l] (1, 2L), i.e. BN stats
    grouping AND lane broadcast in a single matmul, with 1/(N*H*W) folded in.
    """
    lanes = width * c_out
    p = np.zeros((lanes, lanes), np.float32)
    for a in range(lanes):
        for b in range(lanes):
            if a % c_out == b % c_out:
                p[a, b] = inv_count
    big = np.zeros((2 * lanes, 2 * lanes), np.float32)
    big[:lanes, :lanes] = p
    big[lanes:, lanes:] = p
    return jnp.asarray(big)


def _pool_matrices(n, h, w, c_out, h_out, w_out, out_lane_pad):
    """0/1 matrices for AvgPool2d(3, stride=2, padding=1, count_include_pad=True).

    1/9 is folded into pw; pw columns are zero-padded to out_lane_pad so the kernel's
    output slab is lane-dense (full-width vst).
    """
    pw = np.zeros((w * c_out, out_lane_pad), np.float32)                # kw taps + W stride-2
    for wo in range(w_out):
        for kw in range(3):
            wi = 2 * wo + kw - 1
            if 0 <= wi < w:
                for c in range(c_out):
                    pw[wi * c_out + c, wo * c_out + c] = 1.0 / 9.0
    ph = np.zeros((n * h_out, n * h), np.float32)                       # kh taps + H stride-2
    for b in range(n):
        for ho in range(h_out):
            for kh in range(3):
                hi = 2 * ho + kh - 1
                if 0 <= hi < h:
                    ph[b * h_out + ho, b * h + hi] = 1.0
    return jnp.asarray(pw), jnp.asarray(ph)


# ----------------------------------------------------------------------------
# Fused Pallas kernel: (PDC-conv -> BN -> ReLU) x2 -> AvgPool(3, s=2, p=1)
# ----------------------------------------------------------------------------
def _make_kernel(h):
    def kernel(x_ref, m1_ref, m2_ref, p_ref, pw_ref, ph_ref, out_ref):
        # x_ref  : (N*H, Kin_pad)            lane-dense input activations (zero-padded lanes)
        # m1_ref : (3*Kin_pad, W*Cout)       conv-1 stacked banded tap matrix
        # m2_ref : (3*W*Cout, W*Cout)        conv-2 stacked banded tap matrix
        # p_ref  : (2*W*Cout, 2*W*Cout)      BN channel-averaging projector (1/count folded)
        # pw_ref : (W*Cout, out_pad)         avg-pool kw taps + W stride-2 (+1/9 folded)
        # ph_ref : (N*Hout, N*H)             avg-pool kh taps + H stride-2
        # out_ref: (N*Hout, out_pad)         lane-dense output slab

        def conv(act, m_ref):
            # SAME 3x3 conv: kh via sublane rolls (XLU) + per-image boundary mask (VPU),
            # kw + channel mix + W-padding via ONE stacked band matmul (MXU).
            r, kp = act.shape
            row = lax.broadcasted_iota(jnp.int32, (r, kp), 0) % h
            up = jnp.where(row > 0, pltpu.roll(act, 1, axis=0), 0.0)          # src row r-1
            down = jnp.where(row < h - 1, pltpu.roll(act, r - 1, axis=0), 0.0)  # src row r+1
            stacked = jnp.concatenate([up, act, down], axis=1)                # (r, 3*kp)
            return jnp.dot(stacked, m_ref[...], preferred_element_type=jnp.float32)

        def bn_relu(y):
            # BatchNorm2d training-mode batch stats (biased var, gamma=1, beta=0), one pass.
            # TODO(synk): E[x^2]-mean^2 can cancel for large activations; use a two-pass /
            # Welford reduction when scaling this up.
            lanes = y.shape[1]
            stats = jnp.concatenate(
                [jnp.sum(y, axis=0, keepdims=True),
                 jnp.sum(y * y, axis=0, keepdims=True)], axis=1)              # (1, 2L)
            mom = jnp.dot(stats, p_ref[...], preferred_element_type=jnp.float32)
            mean_l = mom[:, :lanes]                                           # per-lane mean
            ex2_l = mom[:, lanes:]                                            # per-lane E[x^2]
            inv_std_l = lax.rsqrt(ex2_l - mean_l * mean_l + BN_EPS)           # EUP
            return jnp.maximum((y - mean_l) * inv_std_l, 0.0)

        h1 = bn_relu(conv(x_ref[...], m1_ref))                                # (N*H, W*Cout)
        h2 = bn_relu(conv(h1, m2_ref))                                        # (N*H, W*Cout)

        # Fused AvgPool2d(3, stride=2, padding=1, count_include_pad=True); 1/9 is in pw.
        pooled_w = jnp.dot(h2, pw_ref[...], preferred_element_type=jnp.float32)
        out_ref[...] = jnp.dot(ph_ref[...], pooled_w, preferred_element_type=jnp.float32)

    return kernel


# ----------------------------------------------------------------------------
# Wrapper
# ----------------------------------------------------------------------------
def pdcblock2_forward(x_nchw, w1_raw, w2_raw, theta=THETA):
    n, c_in, h, w = x_nchw.shape
    c_out = w1_raw.shape[0]

    w1 = make_effective_pdc_weight(w1_raw, theta)                       # (3,3,Cin,Cout)
    w2 = make_effective_pdc_weight(w2_raw, theta)                       # (3,3,Cout,Cout)

    # NCHW -> NHWC -> lane-dense (N*H, W*Cin), zero-padded to a multiple of 128 lanes.
    in_lanes = w * c_in
    in_pad = _round_up(in_lanes, _LANES)
    x2d = jnp.transpose(x_nchw, (0, 2, 3, 1)).astype(jnp.float32).reshape(n * h, in_lanes)
    if in_pad > in_lanes:
        x2d = jnp.pad(x2d, ((0, 0), (0, in_pad - in_lanes)))

    mid_lanes = w * c_out
    # TODO(synk): if W*Cout is not a multiple of 128, pad the conv output lanes too so the
    # BN lane-concat and intermediate slabs stay lane-dense (test shape: 16*8 = 128 exact).
    m1 = _stacked_band_matrix(w1, w, in_pad)                            # (3*in_pad,  W*Cout)
    m2 = _stacked_band_matrix(w2, w, mid_lanes)                         # (3*W*Cout, W*Cout)
    p_bn = _bn_projection(w, c_out, 1.0 / (n * h * w))                  # (2*W*Cout, 2*W*Cout)

    h_out = (h + 2 - 3) // 2 + 1
    w_out = (w + 2 - 3) // 2 + 1
    out_pad = _round_up(w_out * c_out, _LANES)
    pw, ph = _pool_matrices(n, h, w, c_out, h_out, w_out, out_pad)

    vmem = pl.BlockSpec(memory_space=pltpu.MemorySpace.VMEM)
    out2d = pl.pallas_call(
        _make_kernel(h),
        out_shape=jax.ShapeDtypeStruct((n * h_out, out_pad), jnp.float32),
        in_specs=[vmem] * 6,
        out_specs=vmem,
    )(x2d, m1, m2, p_bn, pw, ph)

    out = out2d[:, : w_out * c_out].reshape(n, h_out, w_out, c_out)     # (N,Hout,Wout,Cout)
    return jnp.transpose(out, (0, 3, 1, 2))                             # NCHW


# ----------------------------------------------------------------------------
# Pure-JAX reference (XLA convs) for verification
# ----------------------------------------------------------------------------
def _reference(x_nchw, w1_raw, w2_raw, theta=THETA):
    def bn_relu(y):
        mean = jnp.mean(y, axis=(0, 1, 2), keepdims=True)
        var = jnp.mean((y - mean) ** 2, axis=(0, 1, 2), keepdims=True)
        return jnp.maximum((y - mean) * lax.rsqrt(var + BN_EPS), 0.0)

    dn = ("NHWC", "HWIO", "NHWC")
    x = jnp.transpose(x_nchw, (0, 2, 3, 1)).astype(jnp.float32)
    w1 = make_effective_pdc_weight(w1_raw, theta)
    w2 = make_effective_pdc_weight(w2_raw, theta)
    y = bn_relu(lax.conv_general_dilated(x, w1, (1, 1), ((1, 1), (1, 1)),
                                         dimension_numbers=dn,
                                         precision=lax.Precision.HIGHEST))
    y = bn_relu(lax.conv_general_dilated(y, w2, (1, 1), ((1, 1), (1, 1)),
                                         dimension_numbers=dn,
                                         precision=lax.Precision.HIGHEST))
    s = lax.reduce_window(y, 0.0, lax.add, (1, 3, 3, 1), (1, 2, 2, 1),
                          ((0, 0), (1, 1), (1, 1), (0, 0)))
    return jnp.transpose(s / 9.0, (0, 3, 1, 2))


if __name__ == "__main__":
    key = jax.random.PRNGKey(0)
    k_x, k_w1, k_w2 = jax.random.split(key, 3)

    N, IN_CH, OUT_CH, H, W = 2, 4, 8, 16, 16
    x = jax.random.normal(k_x, (N, IN_CH, H, W), jnp.float32)
    # Conv_PDC stores its weight as nn.Conv2d(in, out, kernel_size=(1, 8), bias=False)
    w1_raw = jax.random.normal(k_w1, (OUT_CH, IN_CH, 1, 8), jnp.float32) * 0.1
    w2_raw = jax.random.normal(k_w2, (OUT_CH, OUT_CH, 1, 8), jnp.float32) * 0.1

    out = jax.block_until_ready(jax.jit(pdcblock2_forward)(x, w1_raw, w2_raw))
    ref = jax.block_until_ready(_reference(x, w1_raw, w2_raw))

    assert out.shape == (N, OUT_CH, H // 2, W // 2), out.shape
    # MXU accumulation order differs slightly from the XLA conv reference.
    np.testing.assert_allclose(np.asarray(out), np.asarray(ref), rtol=5e-4, atol=5e-4)

    print("KERNEL_OK")
</pallas_src>

<mosaic_0001>
module attributes {stable_mosaic.version = 11 : i64} {
  func.func @kernel(%arg0: memref<32x128xf32, #tpu.memory_space<vmem>>, %arg1: memref<384x128xf32, #tpu.memory_space<vmem>>, %arg2: memref<384x128xf32, #tpu.memory_space<vmem>>, %arg3: memref<256x256xf32, #tpu.memory_space<vmem>>, %arg4: memref<128x128xf32, #tpu.memory_space<vmem>>, %arg5: memref<16x32xf32, #tpu.memory_space<vmem>>, %arg6: memref<16x128xf32, #tpu.memory_space<vmem>>) attributes {dimension_semantics = [], scalar_prefetch = 0 : i64, scratch_operands = 0 : i64, tpu.core_type = #tpu.core_type<tc>} {
    %c0 = arith.constant 0 : index
    %c0_0 = arith.constant 0 : index
    %0 = vector.load %arg0[%c0, %c0_0] : memref<32x128xf32, #tpu.memory_space<vmem>>, vector<32x128xf32>
    %1 = tpu.iota {dimensions = array<i32: 0>} : vector<32x128xi32>
    %c16_i32 = arith.constant 16 : i32
    %c0_i32 = arith.constant 0 : i32
    %2 = arith.cmpi eq, %c16_i32, %c0_i32 : i32
    %c1_i32 = arith.constant 1 : i32
    %3 = arith.select %2, %c1_i32, %c16_i32 : i32
    %4 = vector.broadcast %3 : i32 to vector<32x128xi32>
    %5 = arith.remsi %1, %4 : vector<32x128xi32>
    %c0_i32_1 = arith.constant 0 : i32
    %6 = vector.broadcast %c0_i32_1 : i32 to vector<32x128xi32>
    %7 = arith.cmpi ne, %5, %6 : vector<32x128xi32>
    %c0_i32_2 = arith.constant 0 : i32
    %8 = vector.broadcast %c0_i32_2 : i32 to vector<32x128xi32>
    %9 = arith.cmpi slt, %5, %8 : vector<32x128xi32>
    %c0_i32_3 = arith.constant 0 : i32
    %10 = arith.cmpi slt, %3, %c0_i32_3 : i32
    %11 = vector.broadcast %10 : i1 to vector<32x128xi1>
    %12 = vector.broadcast %11 : vector<32x128xi1> to vector<32x128xi1>
    %13 = arith.xori %9, %12 : vector<32x128xi1>
    %14 = arith.andi %13, %7 : vector<32x128xi1>
    %15 = vector.broadcast %3 : i32 to vector<32x128xi32>
    %16 = arith.addi %5, %15 : vector<32x128xi32>
    %17 = arith.select %14, %16, %5 : vector<32x128xi1>, vector<32x128xi32>
    %c0_i32_4 = arith.constant 0 : i32
    %18 = vector.broadcast %c0_i32_4 : i32 to vector<32x128xi32>
    %19 = arith.cmpi sgt, %17, %18 : vector<32x128xi32>
    %c1_i32_5 = arith.constant 1 : i32
    %20 = tpu.dynamic_rotate %0 by %c1_i32_5 dim 0 : vector<32x128xf32>, i32 -> vector<32x128xf32>
    %cst = arith.constant 0.000000e+00 : f32
    %21 = vector.broadcast %cst : f32 to vector<32x128xf32>
    %22 = arith.select %19, %20, %21 : vector<32x128xi1>, vector<32x128xf32>
    %c15_i32 = arith.constant 15 : i32
    %23 = vector.broadcast %c15_i32 : i32 to vector<32x128xi32>
    %24 = arith.cmpi slt, %17, %23 : vector<32x128xi32>
    %c31_i32 = arith.constant 31 : i32
    %25 = tpu.dynamic_rotate %0 by %c31_i32 dim 0 : vector<32x128xf32>, i32 -> vector<32x128xf32>
    %cst_6 = arith.constant 0.000000e+00 : f32
    %26 = vector.broadcast %cst_6 : f32 to vector<32x128xf32>
    %27 = arith.select %24, %25, %26 : vector<32x128xi1>, vector<32x128xf32>
    %28 = tpu.concatenate %22, %0, %27 in 1 : vector<32x128xf32>, vector<32x128xf32>, vector<32x128xf32> -> vector<32x384xf32>
    %c0_7 = arith.constant 0 : index
    %c0_8 = arith.constant 0 : index
    %29 = vector.load %arg1[%c0_7, %c0_8] : memref<384x128xf32, #tpu.memory_space<vmem>>, vector<384x128xf32>
    %cst_9 = arith.constant dense<0.000000e+00> : vector<32x128xf32>
    %30 = tpu.matmul %28, %29, %cst_9 {dimension_numbers = #tpu.dot_dimension_numbers<[1], [0], [0], [1], [0, 0, 1, 1], [], []>} : vector<32x384xf32>, vector<384x128xf32>, vector<32x128xf32> -> vector<32x128xf32>
    %cst_10 = arith.constant dense<0.000000e+00> : vector<128xf32>
    %31 = vector.multi_reduction <add>, %30, %cst_10 [0] : vector<32x128xf32> to vector<128xf32>
    %32 = vector.shape_cast %31 : vector<128xf32> to vector<1x128xf32>
    %33 = arith.mulf %30, %30 : vector<32x128xf32>
    %cst_11 = arith.constant dense<0.000000e+00> : vector<128xf32>
    %34 = vector.multi_reduction <add>, %33, %cst_11 [0] : vector<32x128xf32> to vector<128xf32>
    %35 = vector.shape_cast %34 : vector<128xf32> to vector<1x128xf32>
    %36 = tpu.concatenate %32, %35 in 1 : vector<1x128xf32>, vector<1x128xf32> -> vector<1x256xf32>
    %c0_12 = arith.constant 0 : index
    %c0_13 = arith.constant 0 : index
    %37 = vector.load %arg3[%c0_12, %c0_13] : memref<256x256xf32, #tpu.memory_space<vmem>>, vector<256x256xf32>
    %cst_14 = arith.constant dense<0.000000e+00> : vector<1x256xf32>
    %38 = tpu.matmul %36, %37, %cst_14 {dimension_numbers = #tpu.dot_dimension_numbers<[1], [0], [0], [1], [0, 0, 1, 1], [], []>} : vector<1x256xf32>, vector<256x256xf32>, vector<1x256xf32> -> vector<1x256xf32>
    %39 = vector.extract_strided_slice %38 {offsets = [0, 0], sizes = [1, 128], strides = [1, 1]} : vector<1x256xf32> to vector<1x128xf32>
    %40 = vector.extract_strided_slice %38 {offsets = [0, 128], sizes = [1, 128], strides = [1, 1]} : vector<1x256xf32> to vector<1x128xf32>
    %41 = arith.mulf %39, %39 : vector<1x128xf32>
    %42 = arith.subf %40, %41 : vector<1x128xf32>
    %cst_15 = arith.constant 9.99999974E-6 : f32
    %43 = vector.broadcast %cst_15 : f32 to vector<1x128xf32>
    %44 = arith.addf %42, %43 : vector<1x128xf32>
    %45 = math.rsqrt %44 : vector<1x128xf32>
    %46 = vector.broadcast %39 : vector<1x128xf32> to vector<32x128xf32>
    %47 = arith.subf %30, %46 : vector<32x128xf32>
    %48 = vector.broadcast %45 : vector<1x128xf32> to vector<32x128xf32>
    %49 = arith.mulf %47, %48 : vector<32x128xf32>
    %cst_16 = arith.constant 0.000000e+00 : f32
    %50 = vector.broadcast %cst_16 : f32 to vector<32x128xf32>
    %51 = arith.maximumf %49, %50 : vector<32x128xf32>
    %52 = tpu.iota {dimensions = array<i32: 0>} : vector<32x128xi32>
    %c16_i32_17 = arith.constant 16 : i32
    %c0_i32_18 = arith.constant 0 : i32
    %53 = arith.cmpi eq, %c16_i32_17, %c0_i32_18 : i32
    %c1_i32_19 = arith.constant 1 : i32
    %54 = arith.select %53, %c1_i32_19, %c16_i32_17 : i32
    %55 = vector.broadcast %54 : i32 to vector<32x128xi32>
    %56 = arith.remsi %52, %55 : vector<32x128xi32>
    %c0_i32_20 = arith.constant 0 : i32
    %57 = vector.broadcast %c0_i32_20 : i32 to vector<32x128xi32>
    %58 = arith.cmpi ne, %56, %57 : vector<32x128xi32>
    %c0_i32_21 = arith.constant 0 : i32
    %59 = vector.broadcast %c0_i32_21 : i32 to vector<32x128xi32>
    %60 = arith.cmpi slt, %56, %59 : vector<32x128xi32>
    %c0_i32_22 = arith.constant 0 : i32
    %61 = arith.cmpi slt, %54, %c0_i32_22 : i32
    %62 = vector.broadcast %61 : i1 to vector<32x128xi1>
    %63 = vector.broadcast %62 : vector<32x128xi1> to vector<32x128xi1>
    %64 = arith.xori %60, %63 : vector<32x128xi1>
    %65 = arith.andi %64, %58 : vector<32x128xi1>
    %66 = vector.broadcast %54 : i32 to vector<32x128xi32>
    %67 = arith.addi %56, %66 : vector<32x128xi32>
    %68 = arith.select %65, %67, %56 : vector<32x128xi1>, vector<32x128xi32>
    %c0_i32_23 = arith.constant 0 : i32
    %69 = vector.broadcast %c0_i32_23 : i32 to vector<32x128xi32>
    %70 = arith.cmpi sgt, %68, %69 : vector<32x128xi32>
    %c1_i32_24 = arith.constant 1 : i32
    %71 = tpu.dynamic_rotate %51 by %c1_i32_24 dim 0 : vector<32x128xf32>, i32 -> vector<32x128xf32>
    %cst_25 = arith.constant 0.000000e+00 : f32
    %72 = vector.broadcast %cst_25 : f32 to vector<32x128xf32>
    %73 = arith.select %70, %71, %72 : vector<32x128xi1>, vector<32x128xf32>
    %c15_i32_26 = arith.constant 15 : i32
    %74 = vector.broadcast %c15_i32_26 : i32 to vector<32x128xi32>
    %75 = arith.cmpi slt, %68, %74 : vector<32x128xi32>
    %c31_i32_27 = arith.constant 31 : i32
    %76 = tpu.dynamic_rotate %51 by %c31_i32_27 dim 0 : vector<32x128xf32>, i32 -> vector<32x128xf32>
    %cst_28 = arith.constant 0.000000e+00 : f32
    %77 = vector.broadcast %cst_28 : f32 to vector<32x128xf32>
    %78 = arith.select %75, %76, %77 : vector<32x128xi1>, vector<32x128xf32>
    %79 = tpu.concatenate %73, %51, %78 in 1 : vector<32x128xf32>, vector<32x128xf32>, vector<32x128xf32> -> vector<32x384xf32>
    %c0_29 = arith.constant 0 : index
    %c0_30 = arith.constant 0 : index
    %80 = vector.load %arg2[%c0_29, %c0_30] : memref<384x128xf32, #tpu.memory_space<vmem>>, vector<384x128xf32>
    %cst_31 = arith.constant dense<0.000000e+00> : vector<32x128xf32>
    %81 = tpu.matmul %79, %80, %cst_31 {dimension_numbers = #tpu.dot_dimension_numbers<[1], [0], [0], [1], [0, 0, 1, 1], [], []>} : vector<32x384xf32>, vector<384x128xf32>, vector<32x128xf32> -> vector<32x128xf32>
    %cst_32 = arith.constant dense<0.000000e+00> : vector<128xf32>
    %82 = vector.multi_reduction <add>, %81, %cst_32 [0] : vector<32x128xf32> to vector<128xf32>
    %83 = vector.shape_cast %82 : vector<128xf32> to vector<1x128xf32>
    %84 = arith.mulf %81, %81 : vector<32x128xf32>
    %cst_33 = arith.constant dense<0.000000e+00> : vector<128xf32>
    %85 = vector.multi_reduction <add>, %84, %cst_33 [0] : vector<32x128xf32> to vector<128xf32>
    %86 = vector.shape_cast %85 : vector<128xf32> to vector<1x128xf32>
    %87 = tpu.concatenate %83, %86 in 1 : vector<1x128xf32>, vector<1x128xf32> -> vector<1x256xf32>
    %c0_34 = arith.constant 0 : index
    %c0_35 = arith.constant 0 : index
    %88 = vector.load %arg3[%c0_34, %c0_35] : memref<256x256xf32, #tpu.memory_space<vmem>>, vector<256x256xf32>
    %cst_36 = arith.constant dense<0.000000e+00> : vector<1x256xf32>
    %89 = tpu.matmul %87, %88, %cst_36 {dimension_numbers = #tpu.dot_dimension_numbers<[1], [0], [0], [1], [0, 0, 1, 1], [], []>} : vector<1x256xf32>, vector<256x256xf32>, vector<1x256xf32> -> vector<1x256xf32>
    %90 = vector.extract_strided_slice %89 {offsets = [0, 0], sizes = [1, 128], strides = [1, 1]} : vector<1x256xf32> to vector<1x128xf32>
    %91 = vector.extract_strided_slice %89 {offsets = [0, 128], sizes = [1, 128], strides = [1, 1]} : vector<1x256xf32> to vector<1x128xf32>
    %92 = arith.mulf %90, %90 : vector<1x128xf32>
    %93 = arith.subf %91, %92 : vector<1x128xf32>
    %cst_37 = arith.constant 9.99999974E-6 : f32
    %94 = vector.broadcast %cst_37 : f32 to vector<1x128xf32>
    %95 = arith.addf %93, %94 : vector<1x128xf32>
    %96 = math.rsqrt %95 : vector<1x128xf32>
    %97 = vector.broadcast %90 : vector<1x128xf32> to vector<32x128xf32>
    %98 = arith.subf %81, %97 : vector<32x128xf32>
    %99 = vector.broadcast %96 : vector<1x128xf32> to vector<32x128xf32>
    %100 = arith.mulf %98, %99 : vector<32x128xf32>
    %cst_38 = arith.constant 0.000000e+00 : f32
    %101 = vector.broadcast %cst_38 : f32 to vector<32x128xf32>
    %102 = arith.maximumf %100, %101 : vector<32x128xf32>
    %c0_39 = arith.constant 0 : index
    %c0_40 = arith.constant 0 : index
    %103 = vector.load %arg4[%c0_39, %c0_40] : memref<128x128xf32, #tpu.memory_space<vmem>>, vector<128x128xf32>
    %cst_41 = arith.constant dense<0.000000e+00> : vector<32x128xf32>
    %104 = tpu.matmul %102, %103, %cst_41 {dimension_numbers = #tpu.dot_dimension_numbers<[1], [0], [0], [1], [0, 0, 1, 1], [], []>} : vector<32x128xf32>, vector<128x128xf32>, vector<32x128xf32> -> vector<32x128xf32>
    %c0_42 = arith.constant 0 : index
    %c0_43 = arith.constant 0 : index
    %105 = vector.load %arg5[%c0_42, %c0_43] : memref<16x32xf32, #tpu.memory_space<vmem>>, vector<16x32xf32>
    %cst_44 = arith.constant dense<0.000000e+00> : vector<16x128xf32>
    %106 = tpu.matmul %105, %104, %cst_44 {dimension_numbers = #tpu.dot_dimension_numbers<[1], [0], [0], [1], [0, 0, 1, 1], [], []>} : vector<16x32xf32>, vector<32x128xf32>, vector<16x128xf32> -> vector<16x128xf32>
    %c0_45 = arith.constant 0 : index
    %c0_46 = arith.constant 0 : index
    %107 = vector.load %arg6[%c0_45, %c0_46] : memref<16x128xf32, #tpu.memory_space<vmem>>, vector<16x128xf32>
    tpu.vector_store %arg6[%c0_45, %c0_46], %106 {strides = array<i32>} : memref<16x128xf32, #tpu.memory_space<vmem>>, vector<16x128xf32>,
    return
  }
}

</mosaic_0001>

<llo_original>
// kernel: pdcblock2_forward.1
$region0: #{pdcblock2_forward.1}
  #allocation0 [shape = 'u32[]', space=smem, size = 0x4, offset = 0x4, fixed_abs, tag = 'smem constant byte address 0x4 - core index']
  #allocation1 [shape = 'u32[72,128]{1,0:T(1,128)}', space=vmem, size = 0x9000, scoped, tag = 'internal scratch']
  %s0 = inlined_call_operand.vmem [shape: f32[32,128], index: 0, kind: input, shape index: {}]
  %s1 = inlined_call_operand.vmem [shape: f32[384,128], index: 1, kind: input, shape index: {}]
  %s2 = inlined_call_operand.vmem [shape: f32[384,128], index: 2, kind: input, shape index: {}]
  %s3 = inlined_call_operand.vmem [shape: f32[256,256], index: 3, kind: input, shape index: {}]
  %s4 = inlined_call_operand.vmem [shape: f32[128,128], index: 4, kind: input, shape index: {}]
  %s5 = inlined_call_operand.vmem [shape: f32[16,32], index: 5, kind: input, shape index: {}]
  %s6 = inlined_call_operand.vmem [shape: f32[16,128], index: 6, kind: output, shape index: {}]
  %s7 = sld [smem:[#allocation0]]
  $region34: #{pdcblock2_forward.1} parent=0
    _
  %s9 = ssub.s32 1, %s7
  %s10 = scalar_select 0, %s9, %s7
  // Predicated region
  $region2: #{pdcblock2_forward.1} parent=0 // pred_check
    _
  $region3: #{pdcblock2_forward.1} parent=0 // pred_check_branch
    %12 = sbr.rel (0) target = $region5
  $region4: #{pdcblock2_forward.1} parent=0 // pred_region
    _
  $region5: #{pdcblock2_forward.1} parent=0 // pred_fallthru
    _
  // Predicated region
  $region6: #{pdcblock2_forward.1} parent=0 // pred_check
    _
  $region7: #{pdcblock2_forward.1} parent=0 // pred_check_branch
    %14 = sbr.rel (0) target = $region9
  $region8: #{pdcblock2_forward.1} parent=0 // pred_region
    _
  $region9: #{pdcblock2_forward.1} parent=0 // pred_fallthru
    _
  // Predicated region
  $region10: #{pdcblock2_forward.1} parent=0 // pred_check
    _
  $region11: #{pdcblock2_forward.1} parent=0 // pred_check_branch
    %16 = sbr.rel (0) target = $region13
  $region12: #{pdcblock2_forward.1} parent=0 // pred_region
    _
  $region13: #{pdcblock2_forward.1} parent=0 // pred_fallthru
    _
  // Predicated region
  $region14: #{pdcblock2_forward.1} parent=0 // pred_check
    _
  $region15: #{pdcblock2_forward.1} parent=0 // pred_check_branch
    %18 = sbr.rel (0) target = $region17
  $region16: #{pdcblock2_forward.1} parent=0 // pred_region
    _
  $region17: #{pdcblock2_forward.1} parent=0 // pred_fallthru
    _
  // Predicated region
  $region18: #{pdcblock2_forward.1} parent=0 // pred_check
    _
  $region19: #{pdcblock2_forward.1} parent=0 // pred_check_branch
    %20 = sbr.rel (0) target = $region21
  $region20: #{pdcblock2_forward.1} parent=0 // pred_region
    _
  $region21: #{pdcblock2_forward.1} parent=0 // pred_fallthru
    _
  // Predicated region
  $region22: #{pdcblock2_forward.1} parent=0 // pred_check
    _
  $region23: #{pdcblock2_forward.1} parent=0 // pred_check_branch
    %22 = sbr.rel (0) target = $region25
  $region24: #{pdcblock2_forward.1} parent=0 // pred_region
    _
  $region25: #{pdcblock2_forward.1} parent=0 // pred_fallthru
    _
  %v23 = vld [vmem:[%s0] sm:$0xff]
  %v24 = vld [vmem:[%s0 + $0x8] sm:$0xff]
  %v25 = vld [vmem:[%s0 + $0x10] sm:$0xff]
  %v26 = vld [vmem:[%s0 + $0x18] sm:$0xff]
  %v27 = vlaneseq
  %v28 = vshrl.u32 %v27, 7
  %v29 = vadd.s32 %v28, 8
  %v30 = vadd.s32 %v28, 16
  %v31 = vadd.s32 %v28, 24
  %vm32 = vcmp.lt.s32.totalorder %v28, 0
  %v33 = vsub.s32 0, %v28
  %v34 = vsel %vm32, %v33, %v28
  %v35 = vshrl.u32 %v34, 4
  %v36 = vand.u32 %v34, 15
  %v37 = vsub.s32 0, %v36
  %v38 = vsel %vm32, %v37, %v36
  %vm39 = vcmp.lt.s32.totalorder %v29, 0
  %v40 = vsub.s32 0, %v29
  %v41 = vsel %vm39, %v40, %v29
  %v42 = vshrl.u32 %v41, 4
  %v43 = vand.u32 %v41, 15
  %v44 = vsub.s32 0, %v43
  %v45 = vsel %vm39, %v44, %v43
  %vm46 = vcmp.lt.s32.totalorder %v30, 0
  %v47 = vsub.s32 0, %v30
  %v48 = vsel %vm46, %v47, %v30
  %v49 = vshrl.u32 %v48, 4
  %v50 = vand.u32 %v48, 15
  %v51 = vsub.s32 0, %v50
  %v52 = vsel %vm46, %v51, %v50
  %vm53 = vcmp.lt.s32.totalorder %v31, 0
  %v54 = vsub.s32 0, %v31
  %v55 = vsel %vm53, %v54, %v31
  %v56 = vshrl.u32 %v55, 4
  %v57 = vand.u32 %v55, 15
  %v58 = vsub.s32 0, %v57
  %v59 = vsel %vm53, %v58, %v57
  %vm60 = vcmp.ne.s32.totalorder %v38, 0
  %vm61 = vcmp.ne.s32.totalorder %v45, 0
  %vm62 = vcmp.ne.s32.totalorder %v52, 0
  %vm63 = vcmp.ne.s32.totalorder %v59, 0
  %vm64 = vcmp.lt.s32.totalorder %v38, 0
  %vm65 = vcmp.lt.s32.totalorder %v45, 0
  %vm66 = vcmp.lt.s32.totalorder %v52, 0
  %vm67 = vcmp.lt.s32.totalorder %v59, 0
  %vm68 = vmand %vm64, %vm60
  %vm69 = vmand %vm65, %vm61
  %vm70 = vmand %vm66, %vm62
  %vm71 = vmand %vm67, %vm63
  %v72 = vadd.s32 %v38, 16
  %v73 = vadd.s32 %v45, 16
  %v74 = vadd.s32 %v52, 16
  %v75 = vadd.s32 %v59, 16
  %v76 = vsel %vm68, %v72, %v38
  %v77 = vsel %vm69, %v73, %v45
  %v78 = vsel %vm70, %v74, %v52
  %v79 = vsel %vm71, %v75, %v59
  %vm80 = vcmp.gt.s32.totalorder %v76, 0
  %vm81 = vcmp.gt.s32.totalorder %v77, 0
  %vm82 = vcmp.gt.s32.totalorder %v78, 0
  %vm83 = vcmp.gt.s32.totalorder %v79, 0
  %v84 = vrot.slane %v23, 7
  %v85 = vrot.slane %v24, 7
  %v86 = vrot.slane %v25, 7
  %v87 = vrot.slane %v26, 7
  %vm88 = vcmp.lt.s32.totalorder %v28, 1
  %v89 = vsel %vm88, %v86, %v87
  %v90 = vsel %vm88, %v85, %v86
  %v91 = vsel %vm88, %v84, %v85
  %v92 = vsel %vm88, %v87, %v84
  %v93 = vsel %vm80, %v92, 0.0
  %v94 = vsel %vm81, %v91, 0.0
  %v95 = vsel %vm82, %v90, 0.0
  %v96 = vsel %vm83, %v89, 0.0
  %vm97 = vcmp.lt.s32.totalorder %v76, 15
  %vm98 = vcmp.lt.s32.totalorder %v77, 15
  %vm99 = vcmp.lt.s32.totalorder %v78, 15
  %vm100 = vcmp.lt.s32.totalorder %v79, 15
  %v101 = vrot.slane %v23, 1
  %v102 = vrot.slane %v24, 1
  %v103 = vrot.slane %v25, 1
  %v104 = vrot.slane %v26, 1
  %vm105 = vcmp.lt.s32.totalorder %v28, 7
  %v106 = vsel %vm105, %v103, %v104
  %v107 = vsel %vm105, %v102, %v103
  %v108 = vsel %vm105, %v101, %v102
  %v109 = vsel %vm105, %v104, %v101
  %v110 = vsel %vm97, %v108, 0.0
  %v111 = vsel %vm98, %v107, 0.0
  %v112 = vsel %vm99, %v106, 0.0
  %v113 = vsel %vm100, %v109, 0.0
  %v114 = vld [vmem:[%s1] sm:$0xff]
  %v115 = vld [vmem:[%s1 + $0x8] sm:$0xff]
  %v116 = vld [vmem:[%s1 + $0x10] sm:$0xff]
  %v117 = vld [vmem:[%s1 + $0x18] sm:$0xff]
  %v118 = vld [vmem:[%s1 + $0x20] sm:$0xff]
  %v119 = vld [vmem:[%s1 + $0x28] sm:$0xff]
  %v120 = vld [vmem:[%s1 + $0x30] sm:$0xff]
  %v121 = vld [vmem:[%s1 + $0x38] sm:$0xff]
  %v122 = vld [vmem:[%s1 + $0x40] sm:$0xff]
  %v123 = vld [vmem:[%s1 + $0x48] sm:$0xff]
  %v124 = vld [vmem:[%s1 + $0x50] sm:$0xff]
  %v125 = vld [vmem:[%s1 + $0x58] sm:$0xff]
  %v126 = vld [vmem:[%s1 + $0x60] sm:$0xff]
  %v127 = vld [vmem:[%s1 + $0x68] sm:$0xff]
  %v128 = vld [vmem:[%s1 + $0x70] sm:$0xff]
  %v129 = vld [vmem:[%s1 + $0x78] sm:$0xff]
  %v130 = vld [vmem:[%s1 + $0x80] sm:$0xff]
  %v131 = vld [vmem:[%s1 + $0x88] sm:$0xff]
  %v132 = vld [vmem:[%s1 + $0x90] sm:$0xff]
  %v133 = vld [vmem:[%s1 + $0x98] sm:$0xff]
  %v134 = vld [vmem:[%s1 + $0xa0] sm:$0xff]
  %v135 = vld [vmem:[%s1 + $0xa8] sm:$0xff]
  %v136 = vld [vmem:[%s1 + $0xb0] sm:$0xff]
  %v137 = vld [vmem:[%s1 + $0xb8] sm:$0xff]
  %v138 = vld [vmem:[%s1 + $0xc0] sm:$0xff]
  %v139 = vld [vmem:[%s1 + $0xc8] sm:$0xff]
  %v140 = vld [vmem:[%s1 + $0xd0] sm:$0xff]
  %v141 = vld [vmem:[%s1 + $0xd8] sm:$0xff]
  %v142 = vld [vmem:[%s1 + $0xe0] sm:$0xff]
  %v143 = vld [vmem:[%s1 + $0xe8] sm:$0xff]
  %v144 = vld [vmem:[%s1 + $0xf0] sm:$0xff]
  %v145 = vld [vmem:[%s1 + $0xf8] sm:$0xff]
  %v146 = vld [vmem:[%s1 + $0x100] sm:$0xff]
  %v147 = vld [vmem:[%s1 + $0x108] sm:$0xff]
  %v148 = vld [vmem:[%s1 + $0x110] sm:$0xff]
  %v149 = vld [vmem:[%s1 + $0x118] sm:$0xff]
  %v150 = vld [vmem:[%s1 + $0x120] sm:$0xff]
  %v151 = vld [vmem:[%s1 + $0x128] sm:$0xff]
  %v152 = vld [vmem:[%s1 + $0x130] sm:$0xff]
  %v153 = vld [vmem:[%s1 + $0x138] sm:$0xff]
  %v154 = vld [vmem:[%s1 + $0x140] sm:$0xff]
  %v155 = vld [vmem:[%s1 + $0x148] sm:$0xff]
  %v156 = vld [vmem:[%s1 + $0x150] sm:$0xff]
  %v157 = vld [vmem:[%s1 + $0x158] sm:$0xff]
  %v158 = vld [vmem:[%s1 + $0x160] sm:$0xff]
  %v159 = vld [vmem:[%s1 + $0x168] sm:$0xff]
  %v160 = vld [vmem:[%s1 + $0x170] sm:$0xff]
  %v161 = vld [vmem:[%s1 + $0x178] sm:$0xff]
  %162 = vmatpush.msra.mxu0 %v129
  %163 = vmatpush.msra.mxu0 %v128
  %164 = vmatpush.msra.mxu0 %v127
  %165 = vmatpush.msra.mxu0 %v126
  %166 = vmatpush.msra.mxu0 %v125
  %167 = vmatpush.msra.mxu0 %v124
  %168 = vmatpush.msra.mxu0 %v123
  %169 = vmatpush.msra.mxu0 %v122
  %170 = vmatpush.msra.mxu0 %v121
  %171 = vmatpush.msra.mxu0 %v120
  %172 = vmatpush.msra.mxu0 %v119
  %173 = vmatpush.msra.mxu0 %v118
  %174 = vmatpush.msra.mxu0 %v117
  %175 = vmatpush.msra.mxu0 %v116
  %176 = vmatpush.msra.mxu0 %v115
  %177 = vmatpush.msra.mxu0 %v114
  %178 = vmatmul.f32.gmra.mxu0 %v93
  %v179 = vpop.f32.mrf.mxu0
  %v180 = vadd.f32 0.0, %v179
  %181 = vmatmul.f32.gmra.mxu0 %v94
  %v182 = vpop.f32.mrf.mxu0
  %v183 = vadd.f32 0.0, %v182
  %184 = vmatmul.f32.gmra.mxu0 %v95
  %v185 = vpop.f32.mrf.mxu0
  %v186 = vadd.f32 0.0, %v185
  %187 = vmatmul.f32.gmra.mxu0 %v96
  %v188 = vpop.f32.mrf.mxu0
  %v189 = vadd.f32 0.0, %v188
  %190 = vdwg.mxu0
  %191 = vmatpush.msra.mxu0 %v145
  %192 = vmatpush.msra.mxu0 %v144
  %193 = vmatpush.msra.mxu0 %v143
  %194 = vmatpush.msra.mxu0 %v142
  %195 = vmatpush.msra.mxu0 %v141
  %196 = vmatpush.msra.mxu0 %v140
  %197 = vmatpush.msra.mxu0 %v139
  %198 = vmatpush.msra.mxu0 %v138
  %199 = vmatpush.msra.mxu0 %v137
  %200 = vmatpush.msra.mxu0 %v136
  %201 = vmatpush.msra.mxu0 %v135
  %202 = vmatpush.msra.mxu0 %v134
  %203 = vmatpush.msra.mxu0 %v133
  %204 = vmatpush.msra.mxu0 %v132
  %205 = vmatpush.msra.mxu0 %v131
  %206 = vmatpush.msra.mxu0 %v130
  %207 = vmatmul.f32.gmra.mxu0 %v23
  %v208 = vpop.f32.mrf.mxu0
  %v209 = vadd.f32 %v180, %v208
  %210 = vmatmul.f32.gmra.mxu0 %v24
  %v211 = vpop.f32.mrf.mxu0
  %v212 = vadd.f32 %v183, %v211
  %213 = vmatmul.f32.gmra.mxu0 %v25
  %v214 = vpop.f32.mrf.mxu0
  %v215 = vadd.f32 %v186, %v214
  %216 = vmatmul.f32.gmra.mxu0 %v26
  %v217 = vpop.f32.mrf.mxu0
  %v218 = vadd.f32 %v189, %v217
  %219 = vdwg.mxu0
  %220 = vmatpush.msra.mxu0 %v161
  %221 = vmatpush.msra.mxu0 %v160
  %222 = vmatpush.msra.mxu0 %v159
  %223 = vmatpush.msra.mxu0 %v158
  %224 = vmatpush.msra.mxu0 %v157
  %225 = vmatpush.msra.mxu0 %v156
  %226 = vmatpush.msra.mxu0 %v155
  %227 = vmatpush.msra.mxu0 %v154
  %228 = vmatpush.msra.mxu0 %v153
  %229 = vmatpush.msra.mxu0 %v152
  %230 = vmatpush.msra.mxu0 %v151
  %231 = vmatpush.msra.mxu0 %v150
  %232 = vmatpush.msra.mxu0 %v149
  %233 = vmatpush.msra.mxu0 %v148
  %234 = vmatpush.msra.mxu0 %v147
  %235 = vmatpush.msra.mxu0 %v146
  %236 = vmatmul.f32.gmra.mxu0 %v110
  %v237 = vpop.f32.mrf.mxu0
  %v238 = vadd.f32 %v209, %v237
  %239 = vmatmul.f32.gmra.mxu0 %v111
  %v240 = vpop.f32.mrf.mxu0
  %v241 = vadd.f32 %v212, %v240
  %242 = vmatmul.f32.gmra.mxu0 %v112
  %v243 = vpop.f32.mrf.mxu0
  %v244 = vadd.f32 %v215, %v243
  %245 = vmatmul.f32.gmra.mxu0 %v113
  %v246 = vpop.f32.mrf.mxu0
  %v247 = vadd.f32 %v218, %v246
  %248 = vdwg.mxu0
  %v249 = vadd.f32 %v238, %v241
  %v250 = vadd.f32 %v249, %v244
  %v251 = vadd.f32 %v250, %v247
  %v252 = vrot.slane %v251, 4
  %v253 = vadd.f32 %v251, %v252
  %v254 = vrot.slane %v253, 2
  %v255 = vadd.f32 %v253, %v254
  %v256 = vrot.slane %v255, 1
  %v257 = vadd.f32 %v255, %v256
  %v258 = vmul.f32 %v238, %v238
  %v259 = vmul.f32 %v241, %v241
  %v260 = vmul.f32 %v244, %v244
  %v261 = vmul.f32 %v247, %v247
  %v262 = vadd.f32 %v258, %v259
  %v263 = vadd.f32 %v262, %v260
  %v264 = vadd.f32 %v263, %v261
  %v265 = vrot.slane %v264, 4
  %v266 = vadd.f32 %v264, %v265
  %v267 = vrot.slane %v266, 2
  %v268 = vadd.f32 %v266, %v267
  %v269 = vrot.slane %v268, 1
  %v270 = vadd.f32 %v268, %v269
  %v271 = vld [vmem:[%s3] sm:$0xff]
  %v272 = vld [vmem:[%s3 + $0x8] sm:$0xff]
  %v273 = vld [vmem:[%s3 + $0x10] sm:$0xff]
  %v274 = vld [vmem:[%s3 + $0x18] sm:$0xff]
  %v275 = vld [vmem:[%s3 + $0x20] sm:$0xff]
  %v276 = vld [vmem:[%s3 + $0x28] sm:$0xff]
  %v277 = vld [vmem:[%s3 + $0x30] sm:$0xff]
  %v278 = vld [vmem:[%s3 + $0x38] sm:$0xff]
  %v279 = vld [vmem:[%s3 + $0x40] sm:$0xff]
  %v280 = vld [vmem:[%s3 + $0x48] sm:$0xff]
  %v281 = vld [vmem:[%s3 + $0x50] sm:$0xff]
  %v282 = vld [vmem:[%s3 + $0x58] sm:$0xff]
  %v283 = vld [vmem:[%s3 + $0x60] sm:$0xff]
  %v284 = vld [vmem:[%s3 + $0x68] sm:$0xff]
  %v285 = vld [vmem:[%s3 + $0x70] sm:$0xff]
  %v286 = vld [vmem:[%s3 + $0x78] sm:$0xff]
  %v287 = vld [vmem:[%s3 + $0x80] sm:$0xff]
  %v288 = vld [vmem:[%s3 + $0x88] sm:$0xff]
  %v289 = vld [vmem:[%s3 + $0x90] sm:$0xff]
  %v290 = vld [vmem:[%s3 + $0x98] sm:$0xff]
  %v291 = vld [vmem:[%s3 + $0xa0] sm:$0xff]
  %v292 = vld [vmem:[%s3 + $0xa8] sm:$0xff]
  %v293 = vld [vmem:[%s3 + $0xb0] sm:$0xff]
  %v294 = vld [vmem:[%s3 + $0xb8] sm:$0xff]
  %v295 = vld [vmem:[%s3 + $0xc0] sm:$0xff]
  %v296 = vld [vmem:[%s3 + $0xc8] sm:$0xff]
  %v297 = vld [vmem:[%s3 + $0xd0] sm:$0xff]
  %v298 = vld [vmem:[%s3 + $0xd8] sm:$0xff]
  %v299 = vld [vmem:[%s3 + $0xe0] sm:$0xff]
  %v300 = vld [vmem:[%s3 + $0xe8] sm:$0xff]
  %v301 = vld [vmem:[%s3 + $0xf0] sm:$0xff]
  %v302 = vld [vmem:[%s3 + $0xf8] sm:$0xff]
  %v303 = vld [vmem:[%s3 + $0x100] sm:$0xff]
  %v304 = vld [vmem:[%s3 + $0x108] sm:$0xff]
  %v305 = vld [vmem:[%s3 + $0x110] sm:$0xff]
  %v306 = vld [vmem:[%s3 + $0x118] sm:$0xff]
  %v307 = vld [vmem:[%s3 + $0x120] sm:$0xff]
  %v308 = vld [vmem:[%s3 + $0x128] sm:$0xff]
  %v309 = vld [vmem:[%s3 + $0x130] sm:$0xff]
  %v310 = vld [vmem:[%s3 + $0x138] sm:$0xff]
  %v311 = vld [vmem:[%s3 + $0x140] sm:$0xff]
  %v312 = vld [vmem:[%s3 + $0x148] sm:$0xff]
  %v313 = vld [vmem:[%s3 + $0x150] sm:$0xff]
  %v314 = vld [vmem:[%s3 + $0x158] sm:$0xff]
  %v315 = vld [vmem:[%s3 + $0x160] sm:$0xff]
  %v316 = vld [vmem:[%s3 + $0x168] sm:$0xff]
  %v317 = vld [vmem:[%s3 + $0x170] sm:$0xff]
  %v318 = vld [vmem:[%s3 + $0x178] sm:$0xff]
  %v319 = vld [vmem:[%s3 + $0x180] sm:$0xff]
  %v320 = vld [vmem:[%s3 + $0x188] sm:$0xff]
  %v321 = vld [vmem:[%s3 + $0x190] sm:$0xff]
  %v322 = vld [vmem:[%s3 + $0x198] sm:$0xff]
  %v323 = vld [vmem:[%s3 + $0x1a0] sm:$0xff]
  %v324 = vld [vmem:[%s3 + $0x1a8] sm:$0xff]
  %v325 = vld [vmem:[%s3 + $0x1b0] sm:$0xff]
  %v326 = vld [vmem:[%s3 + $0x1b8] sm:$0xff]
  %v327 = vld [vmem:[%s3 + $0x1c0] sm:$0xff]
  %v328 = vld [vmem:[%s3 + $0x1c8] sm:$0xff]
  %v329 = vld [vmem:[%s3 + $0x1d0] sm:$0xff]
  %v330 = vld [vmem:[%s3 + $0x1d8] sm:$0xff]
  %v331 = vld [vmem:[%s3 + $0x1e0] sm:$0xff]
  %v332 = vld [vmem:[%s3 + $0x1e8] sm:$0xff]
  %v333 = vld [vmem:[%s3 + $0x1f0] sm:$0xff]
  %v334 = vld [vmem:[%s3 + $0x1f8] sm:$0xff]
  %335 = vmatpush.msra.mxu0 %v301
  %336 = vmatpush.msra.mxu0 %v299
  %337 = vmatpush.msra.mxu0 %v297
  %338 = vmatpush.msra.mxu0 %v295
  %339 = vmatpush.msra.mxu0 %v293
  %340 = vmatpush.msra.mxu0 %v291
  %341 = vmatpush.msra.mxu0 %v289
  %342 = vmatpush.msra.mxu0 %v287
  %343 = vmatpush.msra.mxu0 %v285
  %344 = vmatpush.msra.mxu0 %v283
  %345 = vmatpush.msra.mxu0 %v281
  %346 = vmatpush.msra.mxu0 %v279
  %347 = vmatpush.msra.mxu0 %v277
  %348 = vmatpush.msra.mxu0 %v275
  %349 = vmatpush.msra.mxu0 %v273
  %350 = vmatpush.msra.mxu0 %v271
  %351 = vmatmul.f32.gmra.mxu0 %v257
  %v352 = vpop.f32.mrf.mxu0
  %v353 = vadd.f32 0.0, %v352
  %354 = vdwg.mxu0
  %355 = vmatpush.msra.mxu0 %v333
  %356 = vmatpush.msra.mxu0 %v331
  %357 = vmatpush.msra.mxu0 %v329
  %358 = vmatpush.msra.mxu0 %v327
  %359 = vmatpush.msra.mxu0 %v325
  %360 = vmatpush.msra.mxu0 %v323
  %361 = vmatpush.msra.mxu0 %v321
  %362 = vmatpush.msra.mxu0 %v319
  %363 = vmatpush.msra.mxu0 %v317
  %364 = vmatpush.msra.mxu0 %v315
  %365 = vmatpush.msra.mxu0 %v313
  %366 = vmatpush.msra.mxu0 %v311
  %367 = vmatpush.msra.mxu0 %v309
  %368 = vmatpush.msra.mxu0 %v307
  %369 = vmatpush.msra.mxu0 %v305
  %370 = vmatpush.msra.mxu0 %v303
  %371 = vmatmul.f32.gmra.mxu0 %v270
  %v372 = vpop.f32.mrf.mxu0
  %v373 = vadd.f32 %v353, %v372
  %374 = vdwg.mxu0
  %375 = vmatpush.msra.mxu0 %v302
  %376 = vmatpush.msra.mxu0 %v300
  %377 = vmatpush.msra.mxu0 %v298
  %378 = vmatpush.msra.mxu0 %v296
  %379 = vmatpush.msra.mxu0 %v294
  %380 = vmatpush.msra.mxu0 %v292
  %381 = vmatpush.msra.mxu0 %v290
  %382 = vmatpush.msra.mxu0 %v288
  %383 = vmatpush.msra.mxu0 %v286
  %384 = vmatpush.msra.mxu0 %v284
  %385 = vmatpush.msra.mxu0 %v282
  %386 = vmatpush.msra.mxu0 %v280
  %387 = vmatpush.msra.mxu0 %v278
  %388 = vmatpush.msra.mxu0 %v276
  %389 = vmatpush.msra.mxu0 %v274
  %390 = vmatpush.msra.mxu0 %v272
  %391 = vmatmul.f32.gmra.mxu0 %v257
  %v392 = vpop.f32.mrf.mxu0
  %v393 = vadd.f32 0.0, %v392
  %394 = vdwg.mxu0
  %395 = vmatpush.msra.mxu0 %v334
  %396 = vmatpush.msra.mxu0 %v332
  %397 = vmatpush.msra.mxu0 %v330
  %398 = vmatpush.msra.mxu0 %v328
  %399 = vmatpush.msra.mxu0 %v326
  %400 = vmatpush.msra.mxu0 %v324
  %401 = vmatpush.msra.mxu0 %v322
  %402 = vmatpush.msra.mxu0 %v320
  %403 = vmatpush.msra.mxu0 %v318
  %404 = vmatpush.msra.mxu0 %v316
  %405 = vmatpush.msra.mxu0 %v314
  %406 = vmatpush.msra.mxu0 %v312
  %407 = vmatpush.msra.mxu0 %v310
  %408 = vmatpush.msra.mxu0 %v308
  %409 = vmatpush.msra.mxu0 %v306
  %410 = vmatpush.msra.mxu0 %v304
  %411 = vmatmul.f32.gmra.mxu0 %v270
  %v412 = vpop.f32.mrf.mxu0
  %v413 = vadd.f32 %v393, %v412
  %414 = vdwg.mxu0
  %v415 = vmul.f32 %v373, %v373
  %v416 = vsub.f32 %v413, %v415
  %v417 = vadd.f32 %v416, 1e-05
  %v418 = vrsqrt.pop %v417
  %v419 = vmul.f32 %v418, %v417
  %v420 = vmul.f32 %v419, %v418
  %v421 = vmul.f32 0.5, %v420
  %v422 = vsub.f32 1.5, %v421
  %v423 = vmul.f32 %v418, %v422
  %vm424 = vweird.f32 %v417
  %vm425 = vweird.f32 %v418
  %vm426 = vmor %vm424, %vm425
  %v427 = vsel %vm426, %v418, %v423
  %v428 = vperm.slane %v373, 0
  %v429 = vsub.f32 %v238, %v428
  %v430 = vsub.f32 %v241, %v428
  %v431 = vsub.f32 %v244, %v428
  %v432 = vsub.f32 %v247, %v428
  %v433 = vperm.slane %v427, 0
  %v434 = vmul.f32 %v429, %v433
  %v435 = vmul.f32 %v430, %v433
  %v436 = vmul.f32 %v431, %v433
  %v437 = vmul.f32 %v432, %v433
  %v438 = vmax.f32 %v434, 0.0
  %v439 = vmax.f32 %v435, 0.0
  %v440 = vmax.f32 %v436, 0.0
  %v441 = vmax.f32 %v437, 0.0
  %v442 = vrot.slane %v438, 7
  %v443 = vrot.slane %v439, 7
  %v444 = vrot.slane %v440, 7
  %v445 = vrot.slane %v441, 7
  %v446 = vsel %vm88, %v444, %v445
  %v447 = vsel %vm88, %v443, %v444
  %v448 = vsel %vm88, %v442, %v443
  %v449 = vsel %vm88, %v445, %v442
  %v450 = vsel %vm80, %v449, 0.0
  %v451 = vsel %vm81, %v448, 0.0
  %v452 = vsel %vm82, %v447, 0.0
  %v453 = vsel %vm83, %v446, 0.0
  %v454 = vrot.slane %v438, 1
  %v455 = vrot.slane %v439, 1
  %v456 = vrot.slane %v440, 1
  %v457 = vrot.slane %v441, 1
  %v458 = vsel %vm105, %v456, %v457
  %v459 = vsel %vm105, %v455, %v456
  %v460 = vsel %vm105, %v454, %v455
  %v461 = vsel %vm105, %v457, %v454
  %v462 = vsel %vm97, %v460, 0.0
  %v463 = vsel %vm98, %v459, 0.0
  %v464 = vsel %vm99, %v458, 0.0
  %v465 = vsel %vm100, %v461, 0.0
  %v466 = vld [vmem:[%s2] sm:$0xff]
  %v467 = vld [vmem:[%s2 + $0x8] sm:$0xff]
  %v468 = vld [vmem:[%s2 + $0x10] sm:$0xff]
  %v469 = vld [vmem:[%s2 + $0x18] sm:$0xff]
  %v470 = vld [vmem:[%s2 + $0x20] sm:$0xff]
  %v471 = vld [vmem:[%s2 + $0x28] sm:$0xff]
  %v472 = vld [vmem:[%s2 + $0x30] sm:$0xff]
  %v473 = vld [vmem:[%s2 + $0x38] sm:$0xff]
  %v474 = vld [vmem:[%s2 + $0x40] sm:$0xff]
  %v475 = vld [vmem:[%s2 + $0x48] sm:$0xff]
  %v476 = vld [vmem:[%s2 + $0x50] sm:$0xff]
  %v477 = vld [vmem:[%s2 + $0x58] sm:$0xff]
  %v478 = vld [vmem:[%s2 + $0x60] sm:$0xff]
  %v479 = vld [vmem:[%s2 + $0x68] sm:$0xff]
  %v480 = vld [vmem:[%s2 + $0x70] sm:$0xff]
  %v481 = vld [vmem:[%s2 + $0x78] sm:$0xff]
  %v482 = vld [vmem:[%s2 + $0x80] sm:$0xff]
  %v483 = vld [vmem:[%s2 + $0x88] sm:$0xff]
  %v484 = vld [vmem:[%s2 + $0x90] sm:$0xff]
  %v485 = vld [vmem:[%s2 + $0x98] sm:$0xff]
  %v486 = vld [vmem:[%s2 + $0xa0] sm:$0xff]
  %v487 = vld [vmem:[%s2 + $0xa8] sm:$0xff]
  %v488 = vld [vmem:[%s2 + $0xb0] sm:$0xff]
  %v489 = vld [vmem:[%s2 + $0xb8] sm:$0xff]
  %v490 = vld [vmem:[%s2 + $0xc0] sm:$0xff]
  %v491 = vld [vmem:[%s2 + $0xc8] sm:$0xff]
  %v492 = vld [vmem:[%s2 + $0xd0] sm:$0xff]
  %v493 = vld [vmem:[%s2 + $0xd8] sm:$0xff]
  %v494 = vld [vmem:[%s2 + $0xe0] sm:$0xff]
  %v495 = vld [vmem:[%s2 + $0xe8] sm:$0xff]
  %v496 = vld [vmem:[%s2 + $0xf0] sm:$0xff]
  %v497 = vld [vmem:[%s2 + $0xf8] sm:$0xff]
  %v498 = vld [vmem:[%s2 + $0x100] sm:$0xff]
  %v499 = vld [vmem:[%s2 + $0x108] sm:$0xff]
  %v500 = vld [vmem:[%s2 + $0x110] sm:$0xff]
  %v501 = vld [vmem:[%s2 + $0x118] sm:$0xff]
  %v502 = vld [vmem:[%s2 + $0x120] sm:$0xff]
  %v503 = vld [vmem:[%s2 + $0x128] sm:$0xff]
  %v504 = vld [vmem:[%s2 + $0x130] sm:$0xff]
  %v505 = vld [vmem:[%s2 + $0x138] sm:$0xff]
  %v506 = vld [vmem:[%s2 + $0x140] sm:$0xff]
  %v507 = vld [vmem:[%s2 + $0x148] sm:$0xff]
  %v508 = vld [vmem:[%s2 + $0x150] sm:$0xff]
  %v509 = vld [vmem:[%s2 + $0x158] sm:$0xff]
  %v510 = vld [vmem:[%s2 + $0x160] sm:$0xff]
  %v511 = vld [vmem:[%s2 + $0x168] sm:$0xff]
  %v512 = vld [vmem:[%s2 + $0x170] sm:$0xff]
  %v513 = vld [vmem:[%s2 + $0x178] sm:$0xff]
  %514 = vmatpush.msra.mxu0 %v481
  %515 = vmatpush.msra.mxu0 %v480
  %516 = vmatpush.msra.mxu0 %v479
  %517 = vmatpush.msra.mxu0 %v478
  %518 = vmatpush.msra.mxu0 %v477
  %519 = vmatpush.msra.mxu0 %v476
  %520 = vmatpush.msra.mxu0 %v475
  %521 = vmatpush.msra.mxu0 %v474
  %522 = vmatpush.msra.mxu0 %v473
  %523 = vmatpush.msra.mxu0 %v472
  %524 = vmatpush.msra.mxu0 %v471
  %525 = vmatpush.msra.mxu0 %v470
  %526 = vmatpush.msra.mxu0 %v469
  %527 = vmatpush.msra.mxu0 %v468
  %528 = vmatpush.msra.mxu0 %v467
  %529 = vmatpush.msra.mxu0 %v466
  %530 = vmatmul.f32.gmra.mxu0 %v450
  %v531 = vpop.f32.mrf.mxu0
  %v532 = vadd.f32 0.0, %v531
  %533 = vmatmul.f32.gmra.mxu0 %v451
  %v534 = vpop.f32.mrf.mxu0
  %v535 = vadd.f32 0.0, %v534
  %536 = vmatmul.f32.gmra.mxu0 %v452
  %v537 = vpop.f32.mrf.mxu0
  %v538 = vadd.f32 0.0, %v537
  %539 = vmatmul.f32.gmra.mxu0 %v453
  %v540 = vpop.f32.mrf.mxu0
  %v541 = vadd.f32 0.0, %v540
  %542 = vdwg.mxu0
  %543 = vmatpush.msra.mxu0 %v497
  %544 = vmatpush.msra.mxu0 %v496
  %545 = vmatpush.msra.mxu0 %v495
  %546 = vmatpush.msra.mxu0 %v494
  %547 = vmatpush.msra.mxu0 %v493
  %548 = vmatpush.msra.mxu0 %v492
  %549 = vmatpush.msra.mxu0 %v491
  %550 = vmatpush.msra.mxu0 %v490
  %551 = vmatpush.msra.mxu0 %v489
  %552 = vmatpush.msra.mxu0 %v488
  %553 = vmatpush.msra.mxu0 %v487
  %554 = vmatpush.msra.mxu0 %v486
  %555 = vmatpush.msra.mxu0 %v485
  %556 = vmatpush.msra.mxu0 %v484
  %557 = vmatpush.msra.mxu0 %v483
  %558 = vmatpush.msra.mxu0 %v482
  %559 = vmatmul.f32.gmra.mxu0 %v438
  %v560 = vpop.f32.mrf.mxu0
  %v561 = vadd.f32 %v532, %v560
  %562 = vmatmul.f32.gmra.mxu0 %v439
  %v563 = vpop.f32.mrf.mxu0
  %v564 = vadd.f32 %v535, %v563
  %565 = vmatmul.f32.gmra.mxu0 %v440
  %v566 = vpop.f32.mrf.mxu0
  %v567 = vadd.f32 %v538, %v566
  %568 = vmatmul.f32.gmra.mxu0 %v441
  %v569 = vpop.f32.mrf.mxu0
  %v570 = vadd.f32 %v541, %v569
  %571 = vdwg.mxu0
  %572 = vmatpush.msra.mxu0 %v513
  %573 = vmatpush.msra.mxu0 %v512
  %574 = vmatpush.msra.mxu0 %v511
  %575 = vmatpush.msra.mxu0 %v510
  %576 = vmatpush.msra.mxu0 %v509
  %577 = vmatpush.msra.mxu0 %v508
  %578 = vmatpush.msra.mxu0 %v507
  %579 = vmatpush.msra.mxu0 %v506
  %580 = vmatpush.msra.mxu0 %v505
  %581 = vmatpush.msra.mxu0 %v504
  %582 = vmatpush.msra.mxu0 %v503
  %583 = vmatpush.msra.mxu0 %v502
  %584 = vmatpush.msra.mxu0 %v501
  %585 = vmatpush.msra.mxu0 %v500
  %586 = vmatpush.msra.mxu0 %v499
  %587 = vmatpush.msra.mxu0 %v498
  %588 = vmatmul.f32.gmra.mxu0 %v462
  %v589 = vpop.f32.mrf.mxu0
  %v590 = vadd.f32 %v561, %v589
  %591 = vmatmul.f32.gmra.mxu0 %v463
  %v592 = vpop.f32.mrf.mxu0
  %v593 = vadd.f32 %v564, %v592
  %594 = vmatmul.f32.gmra.mxu0 %v464
  %v595 = vpop.f32.mrf.mxu0
  %v596 = vadd.f32 %v567, %v595
  %597 = vmatmul.f32.gmra.mxu0 %v465
  %v598 = vpop.f32.mrf.mxu0
  %v599 = vadd.f32 %v570, %v598
  %600 = vdwg.mxu0
  %v601 = vadd.f32 %v590, %v593
  %v602 = vadd.f32 %v601, %v596
  %v603 = vadd.f32 %v602, %v599
  %v604 = vrot.slane %v603, 4
  %v605 = vadd.f32 %v603, %v604
  %v606 = vrot.slane %v605, 2
  %v607 = vadd.f32 %v605, %v606
  %v608 = vrot.slane %v607, 1
  %v609 = vadd.f32 %v607, %v608
  %v610 = vmul.f32 %v590, %v590
  %v611 = vmul.f32 %v593, %v593
  %v612 = vmul.f32 %v596, %v596
  %v613 = vmul.f32 %v599, %v599
  %v614 = vadd.f32 %v610, %v611
  %v615 = vadd.f32 %v614, %v612
  %v616 = vadd.f32 %v615, %v613
  %v617 = vrot.slane %v616, 4
  %v618 = vadd.f32 %v616, %v617
  %v619 = vrot.slane %v618, 2
  %v620 = vadd.f32 %v618, %v619
  %v621 = vrot.slane %v620, 1
  %v622 = vadd.f32 %v620, %v621
  %623 = vmatpush.msra.mxu0 %v301
  %624 = vmatpush.msra.mxu0 %v299
  %625 = vmatpush.msra.mxu0 %v297
  %626 = vmatpush.msra.mxu0 %v295
  %627 = vmatpush.msra.mxu0 %v293
  %628 = vmatpush.msra.mxu0 %v291
  %629 = vmatpush.msra.mxu0 %v289
  %630 = vmatpush.msra.mxu0 %v287
  %631 = vmatpush.msra.mxu0 %v285
  %632 = vmatpush.msra.mxu0 %v283
  %633 = vmatpush.msra.mxu0 %v281
  %634 = vmatpush.msra.mxu0 %v279
  %635 = vmatpush.msra.mxu0 %v277
  %636 = vmatpush.msra.mxu0 %v275
  %637 = vmatpush.msra.mxu0 %v273
  %638 = vmatpush.msra.mxu0 %v271
  %639 = vmatmul.f32.gmra.mxu0 %v609
  %v640 = vpop.f32.mrf.mxu0
  %v641 = vadd.f32 0.0, %v640
  %642 = vdwg.mxu0
  %643 = vmatpush.msra.mxu0 %v333
  %644 = vmatpush.msra.mxu0 %v331
  %645 = vmatpush.msra.mxu0 %v329
  %646 = vmatpush.msra.mxu0 %v327
  %647 = vmatpush.msra.mxu0 %v325
  %648 = vmatpush.msra.mxu0 %v323
  %649 = vmatpush.msra.mxu0 %v321
  %650 = vmatpush.msra.mxu0 %v319
  %651 = vmatpush.msra.mxu0 %v317
  %652 = vmatpush.msra.mxu0 %v315
  %653 = vmatpush.msra.mxu0 %v313
  %654 = vmatpush.msra.mxu0 %v311
  %655 = vmatpush.msra.mxu0 %v309
  %656 = vmatpush.msra.mxu0 %v307
  %657 = vmatpush.msra.mxu0 %v305
  %658 = vmatpush.msra.mxu0 %v303
  %659 = vmatmul.f32.gmra.mxu0 %v622
  %v660 = vpop.f32.mrf.mxu0
  %v661 = vadd.f32 %v641, %v660
  %662 = vdwg.mxu0
  %663 = vmatpush.msra.mxu0 %v302
  %664 = vmatpush.msra.mxu0 %v300
  %665 = vmatpush.msra.mxu0 %v298
  %666 = vmatpush.msra.mxu0 %v296
  %667 = vmatpush.msra.mxu0 %v294
  %668 = vmatpush.msra.mxu0 %v292
  %669 = vmatpush.msra.mxu0 %v290
  %670 = vmatpush.msra.mxu0 %v288
  %671 = vmatpush.msra.mxu0 %v286
  %672 = vmatpush.msra.mxu0 %v284
  %673 = vmatpush.msra.mxu0 %v282
  %674 = vmatpush.msra.mxu0 %v280
  %675 = vmatpush.msra.mxu0 %v278
  %676 = vmatpush.msra.mxu0 %v276
  %677 = vmatpush.msra.mxu0 %v274
  %678 = vmatpush.msra.mxu0 %v272
  %679 = vmatmul.f32.gmra.mxu0 %v609
  %v680 = vpop.f32.mrf.mxu0
  %v681 = vadd.f32 0.0, %v680
  %682 = vdwg.mxu0
  %683 = vmatpush.msra.mxu0 %v334
  %684 = vmatpush.msra.mxu0 %v332
  %685 = vmatpush.msra.mxu0 %v330
  %686 = vmatpush.msra.mxu0 %v328
  %687 = vmatpush.msra.mxu0 %v326
  %688 = vmatpush.msra.mxu0 %v324
  %689 = vmatpush.msra.mxu0 %v322
  %690 = vmatpush.msra.mxu0 %v320
  %691 = vmatpush.msra.mxu0 %v318
  %692 = vmatpush.msra.mxu0 %v316
  %693 = vmatpush.msra.mxu0 %v314
  %694 = vmatpush.msra.mxu0 %v312
  %695 = vmatpush.msra.mxu0 %v310
  %696 = vmatpush.msra.mxu0 %v308
  %697 = vmatpush.msra.mxu0 %v306
  %698 = vmatpush.msra.mxu0 %v304
  %699 = vmatmul.f32.gmra.mxu0 %v622
  %v700 = vpop.f32.mrf.mxu0
  %v701 = vadd.f32 %v681, %v700
  %702 = vdwg.mxu0
  %v703 = vmul.f32 %v661, %v661
  %v704 = vsub.f32 %v701, %v703
  %v705 = vadd.f32 %v704, 1e-05
  %v706 = vrsqrt.pop %v705
  %v707 = vmul.f32 %v706, %v705
  %v708 = vmul.f32 %v707, %v706
  %v709 = vmul.f32 0.5, %v708
  %v710 = vsub.f32 1.5, %v709
  %v711 = vmul.f32 %v706, %v710
  %vm712 = vweird.f32 %v705
  %vm713 = vweird.f32 %v706
  %vm714 = vmor %vm712, %vm713
  %v715 = vsel %vm714, %v706, %v711
  %v716 = vperm.slane %v661, 0
  %v717 = vsub.f32 %v590, %v716
  %v718 = vsub.f32 %v593, %v716
  %v719 = vsub.f32 %v596, %v716
  %v720 = vsub.f32 %v599, %v716
  %v721 = vperm.slane %v715, 0
  %v722 = vmul.f32 %v717, %v721
  %v723 = vmul.f32 %v718, %v721
  %v724 = vmul.f32 %v719, %v721
  %v725 = vmul.f32 %v720, %v721
  %v726 = vmax.f32 %v722, 0.0
  %v727 = vmax.f32 %v723, 0.0
  %v728 = vmax.f32 %v724, 0.0
  %v729 = vmax.f32 %v725, 0.0
  %v730 = vld [vmem:[%s4] sm:$0xff]
  %v731 = vld [vmem:[%s4 + $0x8] sm:$0xff]
  %v732 = vld [vmem:[%s4 + $0x10] sm:$0xff]
  %v733 = vld [vmem:[%s4 + $0x18] sm:$0xff]
  %v734 = vld [vmem:[%s4 + $0x20] sm:$0xff]
  %v735 = vld [vmem:[%s4 + $0x28] sm:$0xff]
  %v736 = vld [vmem:[%s4 + $0x30] sm:$0xff]
  %v737 = vld [vmem:[%s4 + $0x38] sm:$0xff]
  %v738 = vld [vmem:[%s4 + $0x40] sm:$0xff]
  %v739 = vld [vmem:[%s4 + $0x48] sm:$0xff]
  %v740 = vld [vmem:[%s4 + $0x50] sm:$0xff]
  %v741 = vld [vmem:[%s4 + $0x58] sm:$0xff]
  %v742 = vld [vmem:[%s4 + $0x60] sm:$0xff]
  %v743 = vld [vmem:[%s4 + $0x68] sm:$0xff]
  %v744 = vld [vmem:[%s4 + $0x70] sm:$0xff]
  %v745 = vld [vmem:[%s4 + $0x78] sm:$0xff]
  %746 = vmatpush.msra.mxu0 %v745
  %747 = vmatpush.msra.mxu0 %v744
  %748 = vmatpush.msra.mxu0 %v743
  %749 = vmatpush.msra.mxu0 %v742
  %750 = vmatpush.msra.mxu0 %v741
  %751 = vmatpush.msra.mxu0 %v740
  %752 = vmatpush.msra.mxu0 %v739
  %753 = vmatpush.msra.mxu0 %v738
  %754 = vmatpush.msra.mxu0 %v737
  %755 = vmatpush.msra.mxu0 %v736
  %756 = vmatpush.msra.mxu0 %v735
  %757 = vmatpush.msra.mxu0 %v734
  %758 = vmatpush.msra.mxu0 %v733
  %759 = vmatpush.msra.mxu0 %v732
  %760 = vmatpush.msra.mxu0 %v731
  %761 = vmatpush.msra.mxu0 %v730
  %762 = vmatmul.f32.gmra.mxu0 %v726
  %v763 = vpop.f32.mrf.mxu0
  %v764 = vadd.f32 0.0, %v763
  %765 = vmatmul.f32.gmra.mxu0 %v727
  %v766 = vpop.f32.mrf.mxu0
  %v767 = vadd.f32 0.0, %v766
  %768 = vmatmul.f32.gmra.mxu0 %v728
  %v769 = vpop.f32.mrf.mxu0
  %v770 = vadd.f32 0.0, %v769
  %771 = vmatmul.f32.gmra.mxu0 %v729
  %v772 = vpop.f32.mrf.mxu0
  %v773 = vadd.f32 0.0, %v772
  %774 = vdwg.mxu0
  %v775 = vld [vmem:[%s5] sm:$0xff]
  %v776 = vld [vmem:[%s5 + $0x8] sm:$0xff]
  %vm777 = vcmask 261120
  %v779 = vsel %vm777, %v775, 0
  %v782 = vsel %vm777, %v776, 0
  %784 = vmatpush.msra.mxu0 0.0
  %785 = vmatpush.msra.mxu0 0.0
  %786 = vmatpush.msra.mxu0 0.0
  %787 = vmatpush.msra.mxu0 0.0
  %788 = vmatpush.msra.mxu0 0.0
  %789 = vmatpush.msra.mxu0 0.0
  %790 = vmatpush.msra.mxu0 0.0
  %791 = vmatpush.msra.mxu0 0.0
  %792 = vmatpush.msra.mxu0 0.0
  %793 = vmatpush.msra.mxu0 0.0
  %794 = vmatpush.msra.mxu0 0.0
  %795 = vmatpush.msra.mxu0 0.0
  %796 = vmatpush.msra.mxu0 %v773
  %797 = vmatpush.msra.mxu0 %v770
  %798 = vmatpush.msra.mxu0 %v767
  %799 = vmatpush.msra.mxu0 %v764
  %800 = vmatmul.f32.gmra.mxu0 %v779
  %v801 = vpop.f32.mrf.mxu0
  %v802 = vadd.f32 0.0, %v801
  %803 = vmatmul.f32.gmra.mxu0 %v782
  %v804 = vpop.f32.mrf.mxu0
  %v805 = vadd.f32 0.0, %v804
  %806 = vdwg.mxu0
  %807 = vst [vmem:[%s6] sm:$0xff] %v802
  %808 = vst [vmem:[%s6 + $0x8] sm:$0xff] %v805
  // Predicated region
  $region26: #{pdcblock2_forward.1} parent=0 // pred_check
    _
  $region27: #{pdcblock2_forward.1} parent=0 // pred_check_branch
    %810 = sbr.rel (0) target = $region29
  $region28: #{pdcblock2_forward.1} parent=0 // pred_region
    _
  $region29: #{pdcblock2_forward.1} parent=0 // pred_fallthru
    _
  // Predicated region
  $region30: #{pdcblock2_forward.1} parent=0 // pred_check
    _
  $region31: #{pdcblock2_forward.1} parent=0 // pred_check_branch
    %812 = sbr.rel (0) target = $region33
  $region32: #{pdcblock2_forward.1} parent=0 // pred_region
    _
  $region33: #{pdcblock2_forward.1} parent=0 // pred_fallthru
    _

</llo_original>
